<compile_context>
chip_gen: v5e
topology: v5e:2x2
jax: 0.10.0
libtpu: 0.0.40
codegen_flags: <defaults>
</compile_context>

<pallas_src>
import numpy as np
import jax
import jax.numpy as jnp
from jax.experimental import pallas as pl
from jax.experimental.pallas import tpu as pltpu

KS = 5            # kernel_size
STRIDE = 1
PAD = 4           # padding
HALF = (KS - 1) // 2   # 2
LANE = 128


def _gaussian_1d(ks=KS):
    # Normalised 1-D Gaussian factor; outer(g1, g1) == the normalised 2-D
    # Gaussian built by the PyTorch module (exactly, up to fp rounding).
    mean = (ks - 1) / 2.0
    variance = (ks / 6.0) ** 2.0
    coords = np.arange(ks, dtype=np.float32)
    g = np.exp(-((coords - mean) ** 2) / (2.0 * variance)).astype(np.float32)
    g = g / g.sum()
    return g.astype(np.float32)


def _gaussian_2d(ks=KS):
    # Same math as the PyTorch __init__ (used only for the reference check).
    mean = (ks - 1) / 2.0
    variance = (ks / 6.0) ** 2.0
    coords = np.arange(ks, dtype=np.float32)
    xg = np.tile(coords, ks).reshape(ks, ks)
    yg = xg.T
    g = np.exp(-((xg - mean) ** 2 + (yg - mean) ** 2) / (2.0 * variance))
    g = g / g.sum()
    return g.astype(np.float32)


_W1 = [float(v) for v in _gaussian_1d()]   # symmetric: _W1[HALF-d] == _W1[HALF+d]


def _round_up(a, m):
    return (a + m - 1) // m * m


def _make_kernel(nb, h, w, hp, ho, wl):
    w1 = _W1

    def kernel(x_ref, o_ref, xbuf, hbuf):
        # xbuf: (hp, wl) zero-padded, lane-dense staging buffer.  The image is
        # centred at lane offset HALF and sublane offset PAD; the zero border
        # is written once per body and only the data region is overwritten per
        # batch element (fused padding — no jnp.pad HBM pass).
        xbuf[...] = jnp.zeros_like(xbuf)
        for b in range(nb):                      # static unroll over the block
            xbuf[PAD:PAD + h, HALF:HALF + w] = x_ref[b].astype(jnp.float32)
            xv = xbuf[...]

            # Horizontal (lane) 5-tap pass.  Shifts go to the XLU via
            # pltpu.roll.  Weights are symmetric and the data is centred at
            # lane offset HALF, so the paired +d/-d rolls share one multiply
            # and wrapped lanes land in the zero border.
            hrow = w1[HALF] * xv
            for d in range(1, HALF + 1):
                pair = (pltpu.roll(xv, shift=d, axis=1) +
                        pltpu.roll(xv, shift=wl - d, axis=1))
                hrow = hrow + w1[HALF - d] * pair
            hbuf[...] = hrow

            # Vertical (sublane) 5-tap pass via shifted slices of the temp,
            # again pairing the symmetric +d/-d taps.
            acc = w1[HALF] * hbuf[HALF:HALF + ho, :]
            for d in range(1, HALF + 1):
                acc = acc + w1[HALF - d] * (hbuf[HALF - d:HALF - d + ho, :] +
                                            hbuf[HALF + d:HALF + d + ho, :])

            o_ref[b] = acc.astype(o_ref.dtype)

    return kernel


def _pick_batch_tile(n, h, w, ho, wl):
    # Keep double-buffered in+out blocks around <= ~12 MiB so that, together
    # with the two (hp, wl) f32 scratches, the footprint stays under the
    # 32 MiB scoped-VMEM limit on every generation (v7x has 64 MiB physical).
    per_image_bytes = 4 * (2 * h * w + 2 * ho * wl)
    budget = 12 * 1024 * 1024
    cap = max(1, budget // max(per_image_bytes, 1))
    if n > 1:
        # Keep at least 2 grid steps so the "parallel" batch axis can shard
        # across the two TensorCores on v7x.
        cap = min(cap, (n + 1) // 2)
    cap = min(cap, n)
    nb = 1
    for d in range(1, cap + 1):       # largest divisor of n within budget
        if n % d == 0:
            nb = d
    return int(nb)


def gaussian_filter(x):
    """Pallas TPU equivalent of GaussianFilter.forward. x: (N, 1, H, W)."""
    n, c, h, w = x.shape
    assert c == 1, "GaussianFilter is a single-channel (1->1) conv"
    ho = (h + 2 * PAD - KS) // STRIDE + 1
    wo = (w + 2 * PAD - KS) // STRIDE + 1
    hp = h + 2 * PAD
    wl = _round_up(w + 2 * PAD, LANE)   # lane-dense working / output width

    nb = _pick_batch_tile(n, h, w, ho, wl)
    grid = (n // nb,)

    # TODO(synk): for very large images (where the (hp, wl) f32 scratches and
    # full-image blocks no longer fit scoped VMEM, e.g. 4K frames on v7x), add
    # an H-tile grid axis with a 4-row halo (manual DMA of the valid row
    # window) instead of processing a full image per grid step.

    x3 = x.reshape(n, h, w)

    out = pl.pallas_call(
        _make_kernel(nb, h, w, hp, ho, wl),
        out_shape=jax.ShapeDtypeStruct((n, ho, wl), x.dtype),
        grid=grid,
        in_specs=[pl.BlockSpec((nb, h, w), lambda i: (i, 0, 0))],
        out_specs=pl.BlockSpec((nb, ho, wl), lambda i: (i, 0, 0)),
        scratch_shapes=[
            pltpu.VMEM((hp, wl), jnp.float32),   # zero-padded input slab
            pltpu.VMEM((hp, wl), jnp.float32),   # horizontal-pass temp
        ],
        compiler_params=pltpu.CompilerParams(
            dimension_semantics=("parallel",),
            vmem_limit_bytes=32 * 1024 * 1024,
        ),
    )(x3)

    # Drop the lane padding and restore NCHW layout.
    return out[:, :, :wo].reshape(n, 1, ho, wo)


def _reference(x):
    # Pure-JAX reference (XLA conv) using the exact 2-D kernel for sanity.
    w2 = jnp.asarray(_gaussian_2d()).reshape(1, 1, KS, KS)
    return jax.lax.conv_general_dilated(
        x, w2,
        window_strides=(STRIDE, STRIDE),
        padding=[(PAD, PAD), (PAD, PAD)],
        dimension_numbers=("NCHW", "OIHW", "NCHW"),
    )


if __name__ == "__main__":
    key = jax.random.PRNGKey(0)
    x = jax.random.normal(key, (2, 1, 16, 16), dtype=jnp.float32)

    out = jax.block_until_ready(gaussian_filter(x))
    ref = jax.block_until_ready(_reference(x))

    assert out.shape == (2, 1, 20, 20), out.shape
    assert jnp.allclose(out, ref, atol=1e-5, rtol=1e-5), "mismatch vs XLA conv reference"

    print("KERNEL_OK")
</pallas_src>

<mosaic_0001>
module attributes {stable_mosaic.version = 11 : i64} {
  func.func @kernel(%arg0: i32, %arg1: memref<1x16x16xf32, #tpu.memory_space<vmem>>, %arg2: memref<1x20x128xf32, #tpu.memory_space<vmem>>, %arg3: memref<24x128xf32, #tpu.memory_space<vmem>>, %arg4: memref<24x128xf32, #tpu.memory_space<vmem>>) attributes {dimension_semantics = [#tpu.dimension_semantics<parallel>], iteration_bounds = array<i64: 2>, scalar_prefetch = 0 : i64, scratch_operands = 2 : i64, tpu.core_type = #tpu.core_type<tc>, window_params = [{transform_indices = @transform_0, window_bounds = array<i64: 1, 16, 16>}, {transform_indices = @transform_1, window_bounds = array<i64: 1, 20, 128>}]} {
    %cst = arith.constant 0.000000e+00 : f32
    %0 = vector.broadcast %cst : f32 to vector<24x128xf32>
    %c0 = arith.constant 0 : index
    %c0_0 = arith.constant 0 : index
    %1 = vector.load %arg3[%c0, %c0_0] : memref<24x128xf32, #tpu.memory_space<vmem>>, vector<24x128xf32>
    tpu.vector_store %arg3[%c0, %c0_0], %0 {strides = array<i32>} : memref<24x128xf32, #tpu.memory_space<vmem>>, vector<24x128xf32>,
    %c0_1 = arith.constant 0 : index
    %c0_2 = arith.constant 0 : index
    %c0_3 = arith.constant 0 : index
    %2 = vector.load %arg1[%c0_1, %c0_2, %c0_3] : memref<1x16x16xf32, #tpu.memory_space<vmem>>, vector<1x16x16xf32>
    %3 = vector.shape_cast %2 : vector<1x16x16xf32> to vector<16x16xf32>
    %c4 = arith.constant 4 : index
    %c2 = arith.constant 2 : index
    %4 = vector.load %arg3[%c4, %c2] : memref<24x128xf32, #tpu.memory_space<vmem>>, vector<16x16xf32>
    tpu.vector_store %arg3[%c4, %c2], %3 {strides = array<i32>} : memref<24x128xf32, #tpu.memory_space<vmem>>, vector<16x16xf32>,
    %c0_4 = arith.constant 0 : index
    %c0_5 = arith.constant 0 : index
    %5 = vector.load %arg3[%c0_4, %c0_5] : memref<24x128xf32, #tpu.memory_space<vmem>>, vector<24x128xf32>
    %cst_6 = arith.constant 0.479438335 : f32
    %6 = vector.broadcast %cst_6 : f32 to vector<24x128xf32>
    %7 = arith.mulf %6, %5 : vector<24x128xf32>
    %c1_i32 = arith.constant 1 : i32
    %8 = tpu.dynamic_rotate %5 by %c1_i32 dim 1 : vector<24x128xf32>, i32 -> vector<24x128xf32>
    %c127_i32 = arith.constant 127 : i32
    %9 = tpu.dynamic_rotate %5 by %c127_i32 dim 1 : vector<24x128xf32>, i32 -> vector<24x128xf32>
    %10 = arith.addf %8, %9 : vector<24x128xf32>
    %cst_7 = arith.constant 0.233367682 : f32
    %11 = vector.broadcast %cst_7 : f32 to vector<24x128xf32>
    %12 = arith.mulf %11, %10 : vector<24x128xf32>
    %13 = arith.addf %7, %12 : vector<24x128xf32>
    %c2_i32 = arith.constant 2 : i32
    %14 = tpu.dynamic_rotate %5 by %c2_i32 dim 1 : vector<24x128xf32>, i32 -> vector<24x128xf32>
    %c126_i32 = arith.constant 126 : i32
    %15 = tpu.dynamic_rotate %5 by %c126_i32 dim 1 : vector<24x128xf32>, i32 -> vector<24x128xf32>
    %16 = arith.addf %14, %15 : vector<24x128xf32>
    %cst_8 = arith.constant 0.0269131567 : f32
    %17 = vector.broadcast %cst_8 : f32 to vector<24x128xf32>
    %18 = arith.mulf %17, %16 : vector<24x128xf32>
    %19 = arith.addf %13, %18 : vector<24x128xf32>
    %c0_9 = arith.constant 0 : index
    %c0_10 = arith.constant 0 : index
    %20 = vector.load %arg4[%c0_9, %c0_10] : memref<24x128xf32, #tpu.memory_space<vmem>>, vector<24x128xf32>
    tpu.vector_store %arg4[%c0_9, %c0_10], %19 {strides = array<i32>} : memref<24x128xf32, #tpu.memory_space<vmem>>, vector<24x128xf32>,
    %c2_11 = arith.constant 2 : index
    %c0_12 = arith.constant 0 : index
    %21 = vector.load %arg4[%c2_11, %c0_12] : memref<24x128xf32, #tpu.memory_space<vmem>>, vector<20x128xf32>
    %cst_13 = arith.constant 0.479438335 : f32
    %22 = vector.broadcast %cst_13 : f32 to vector<20x128xf32>
    %23 = arith.mulf %22, %21 : vector<20x128xf32>
    %c1 = arith.constant 1 : index
    %c0_14 = arith.constant 0 : index
    %24 = vector.load %arg4[%c1, %c0_14] : memref<24x128xf32, #tpu.memory_space<vmem>>, vector<20x128xf32>
    %c3 = arith.constant 3 : index
    %c0_15 = arith.constant 0 : index
    %25 = vector.load %arg4[%c3, %c0_15] : memref<24x128xf32, #tpu.memory_space<vmem>>, vector<20x128xf32>
    %26 = arith.addf %24, %25 : vector<20x128xf32>
    %cst_16 = arith.constant 0.233367682 : f32
    %27 = vector.broadcast %cst_16 : f32 to vector<20x128xf32>
    %28 = arith.mulf %27, %26 : vector<20x128xf32>
    %29 = arith.addf %23, %28 : vector<20x128xf32>
    %c0_17 = arith.constant 0 : index
    %c0_18 = arith.constant 0 : index
    %30 = vector.load %arg4[%c0_17, %c0_18] : memref<24x128xf32, #tpu.memory_space<vmem>>, vector<20x128xf32>
    %c4_19 = arith.constant 4 : index
    %c0_20 = arith.constant 0 : index
    %31 = vector.load %arg4[%c4_19, %c0_20] : memref<24x128xf32, #tpu.memory_space<vmem>>, vector<20x128xf32>
    %32 = arith.addf %30, %31 : vector<20x128xf32>
    %cst_21 = arith.constant 0.0269131567 : f32
    %33 = vector.broadcast %cst_21 : f32 to vector<20x128xf32>
    %34 = arith.mulf %33, %32 : vector<20x128xf32>
    %35 = arith.addf %29, %34 : vector<20x128xf32>
    %c0_22 = arith.constant 0 : index
    %c0_23 = arith.constant 0 : index
    %c0_24 = arith.constant 0 : index
    %36 = vector.load %arg2[%c0_22, %c0_23, %c0_24] : memref<1x20x128xf32, #tpu.memory_space<vmem>>, vector<1x20x128xf32>
    %37 = vector.shape_cast %36 : vector<1x20x128xf32> to vector<20x128xf32>
    %38 = vector.shape_cast %35 : vector<20x128xf32> to vector<1x20x128xf32>
    tpu.vector_store %arg2[%c0_22, %c0_23, %c0_24], %38 {strides = array<i32>} : memref<1x20x128xf32, #tpu.memory_space<vmem>>, vector<1x20x128xf32>,
    return
  }
  func.func @transform_0(%arg0: i32) -> (i32, i32, i32) {
    %c0_i32 = arith.constant 0 : i32
    %c0_i32_0 = arith.constant 0 : i32
    %c0_i32_1 = arith.constant 0 : i32
    return %arg0, %c0_i32, %c0_i32_0 : i32, i32, i32
  }
  func.func @transform_1(%arg0: i32) -> (i32, i32, i32) {
    %c0_i32 = arith.constant 0 : i32
    %c0_i32_0 = arith.constant 0 : i32
    %c0_i32_1 = arith.constant 0 : i32
    return %arg0, %c0_i32, %c0_i32_0 : i32, i32, i32
  }
}

</mosaic_0001>

<llo_original>
// kernel: tpu_custom_call.1
$region0: #{tpu_custom_call.1}
  #allocation0 [shape = 'u32[]', space=smem, size = 0x4, offset = 0x4, fixed_abs, tag = 'smem constant byte address 0x4 - core index']
  #allocation1 [shape = 'u32[72,128]{1,0:T(1,128)}', space=vmem, size = 0x9000, scoped, tag = 'internal scratch']
  #allocation2 [shape = 'f32[24,128]{1,0:T(8,128)}', space=vmem, size = 0x3000, scoped, tag = 'scratch operand']
  #allocation3 [shape = 'f32[24,128]{1,0:T(8,128)}', space=vmem, size = 0x3000, scoped, tag = 'scratch operand']
  %s0 = inlined_call_operand.hbm [shape: f32[2,16,16], index: 0, kind: input, shape index: {}]
  %s1 = inlined_call_operand.vmem [shape: f32[2,20,128], index: 1, kind: output, shape index: {}]
  %s2 = sld [smem:[#allocation0]]
  $region41: #{tpu_custom_call.1} parent=0
    _
  %s4 = ssub.s32 1, %s2
  %s5 = scalar_select 0, %s4, %s2
  $region1: #{tpu_custom_call.1} parent=0
    #allocation4 [shape = 'u8[16384]{0}', space=vmem, size = 0x4000, scoped, tag = 'input window, operand 0']
    #allocation5 [shape = 's32[2]{0}', space=sflag, size = 0x8, scoped, tag = 'scoped memory for tpu_custom_call.1']
    %6 = vsyncpa [#allocation5], 0
    %s7 = scalar_lea.sflag [#allocation5], 1
    %8 = vsyncpa %s7, 0
    loop: start=0, step=1, limit=4
    $region2: #{tpu_custom_call.1} parent=1 // loop_pre_header
      _
    $region3: #{tpu_custom_call.1} parent=1 // loop_header
      %s10 = sphi 0, %s14
      %p11 = scmp.ge.s32.totalorder %s10, 4
      %s20 = sphi 0, %s22
      %s23 = sphi 0, %s20
      %s24 = sphi 0, %s23
      %s40 = sphi 0, %s24
      %s46 = sphi 0, %s48
      %s49 = sphi 0, %s46
      %s50 = sphi 0, %s49
      %s66 = sphi 0, %s50
    $region4: #{tpu_custom_call.1} parent=1 // loop_header_branch
      %13 = sbr.rel (%p11) target = $region8
    $region5: #{tpu_custom_call.1} parent=1 // loop_body
      %s15 = ssub.s32 %s10, 1
      %s16 = ssub.s32 %s10, 2
      %s17 = sadd.s32 %s10, 1
      %s18 = ssub.s32 %s10, %s17
      %p19 = scmp.eq.s32.totalorder %s18, 0
      %s21 = sadd.s32 %s20, 1
      %s22 = scalar_select %p19, %s20, %s21
      %p25 = pneg %p19
      %p26 = scmp.eq.s32.totalorder %s10, 1
      %p27 = por %p25, %p26
      %p28 = scmp.ne.s32.totalorder %s20, %s23
      %p29 = scmp.eq.s32.totalorder %s10, 0
      %p30 = por %p28, %p29
      %p31 = scmp.ne.s32.totalorder %s20, %s23
      %p32 = scmp.eq.s32.totalorder %s15, 1
      %p33 = por %p31, %p32
      %p34 = scmp.ne.s32.totalorder %s23, %s24
      %p35 = scmp.eq.s32.totalorder %s15, 0
      %p36 = por %p34, %p35
      %p37 = scmp.ne.s32.totalorder %s23, %s24
      %p38 = scmp.eq.s32.totalorder %s16, 1
      %p39 = por %p37, %p38
      %p41 = scmp.ne.s32.totalorder %s24, %s40
      %p42 = scmp.eq.s32.totalorder %s16, 0
      %p43 = por %p41, %p42
      %s44 = ssub.s32 %s10, %s17
      %p45 = scmp.eq.s32.totalorder %s44, 0
      %s47 = sadd.s32 %s46, 1
      %s48 = scalar_select %p45, %s46, %s47
      %p51 = pneg %p45
      %p52 = scmp.eq.s32.totalorder %s10, 1
      %p53 = por %p51, %p52
      %p54 = scmp.ne.s32.totalorder %s46, %s49
      %p55 = scmp.eq.s32.totalorder %s10, 0
      %p56 = por %p54, %p55
      %p57 = scmp.ne.s32.totalorder %s46, %s49
      %p58 = scmp.eq.s32.totalorder %s15, 1
      %p59 = por %p57, %p58
      %p60 = scmp.ne.s32.totalorder %s49, %s50
      %p61 = scmp.eq.s32.totalorder %s15, 0
      %p62 = por %p60, %p61
      %p63 = scmp.ne.s32.totalorder %s49, %s50
      %p64 = scmp.eq.s32.totalorder %s16, 1
      %p65 = por %p63, %p64
      %p67 = scmp.ne.s32.totalorder %s50, %s66
      %p68 = scmp.eq.s32.totalorder %s16, 0
      %p69 = por %p67, %p68
      %p70 = scmp.le.s32.totalorder 1, %s10
      %p71 = scmp.lt.s32.totalorder %s10, 3
      %p72 = pnand %p70, %p71
      %p73 = pneg %p72
      // Predicated region
      $region9: #{tpu_custom_call.1} parent=5 // pred_check
        _
      $region10: #{tpu_custom_call.1} parent=5 // pred_check_branch
        %75 = sbr.rel (%p72) target = $region12
      $region11: #{tpu_custom_call.1} parent=5 // pred_region
        %s76 = ssub.s32 %s10, 1
      $region12: #{tpu_custom_call.1} parent=5 // pred_fallthru
        _
      %p77 = scmp.lt.s32.totalorder %s10, 2
      // Predicated region
      $region13: #{tpu_custom_call.1} parent=5 // pred_check
        %p78 = pneg %p77
      $region14: #{tpu_custom_call.1} parent=5 // pred_check_branch
        %80 = sbr.rel (%p78) target = $region16
      $region15: #{tpu_custom_call.1} parent=5 // pred_region
        // Predicated region
        $region17: #{tpu_custom_call.1} parent=15 // pred_check
          %p81 = pneg %p30
        $region18: #{tpu_custom_call.1} parent=15 // pred_check_branch
          %83 = sbr.rel (%p81) target = $region20
        $region19: #{tpu_custom_call.1} parent=15 // pred_region
          %s84 = sand.u32 %s20, 1
          %s85 = scalar_lea.sflag [#allocation5], %s84
          %s86 = sand.u32 %s20, 1
          %s87 = smul.addr %s86, 16
          %s88 = scalar_lea.vmem [#allocation4], %s87
          %90 = vsyncadd %s85, 0
          %s91 = smul.addr %s10, 2
          %s92 = smul.addr %s91, 8
          %s93 = scalar_lea.hbm %s0, %s92
          %s94 = sshll.u32 %s93, 4
          %s95 = int_to_ptr.hbm [resolvable:$true] %s94
          %s96 = sshll.u32 %s88, 4
          %s97 = int_to_ptr.vmem [resolvable:$true] %s96
          %102 = dma.hbm_to_vmem [thread:$0]  %s95, 256, %s97, %s85, 128, 128, 8
        $region20: #{tpu_custom_call.1} parent=15 // pred_fallthru
          _
      $region16: #{tpu_custom_call.1} parent=5 // pred_fallthru
        _
      %p103 = scmp.le.s32.totalorder 1, %s10
      %p104 = scmp.lt.s32.totalorder %s10, 3
      %p105 = pnand %p103, %p104
      %p106 = pneg %p105
      // Predicated region
      $region21: #{tpu_custom_call.1} parent=5 // pred_check
        _
      $region22: #{tpu_custom_call.1} parent=5 // pred_check_branch
        %108 = sbr.rel (%p105) target = $region24
      $region23: #{tpu_custom_call.1} parent=5 // pred_region
        %s109 = ssub.s32 %s10, 1
        %s110 = sand.u32 %s23, 1
        %s111 = scalar_lea.sflag [#allocation5], %s110
        %s112 = sand.u32 %s23, 1
        %s113 = smul.addr %s112, 16
        %s114 = scalar_lea.vmem [#allocation4], %s113
        // Predicated region
        $region25: #{tpu_custom_call.1} parent=23 // pred_check
          %p115 = pneg %p36
        $region26: #{tpu_custom_call.1} parent=23 // pred_check_branch
          %117 = sbr.rel (%p115) target = $region28
        $region27: #{tpu_custom_call.1} parent=23 // pred_region
          %119 = dma.done %s111, 256
        $region28: #{tpu_custom_call.1} parent=23 // pred_fallthru
          _
        %s120 = sand.u32 %s23, 1
        %s121 = scalar_lea.sflag [#allocation5], %s120
        %s122 = sand.u32 %s23, 1
        %s123 = smul.addr %s122, 16
        %s124 = scalar_lea.vmem [#allocation4], %s123
        %p125 = pneg %p36
        %p126 = pneg %p33
        %p127 = pneg %p62
        %p128 = pneg %p59
        %p129 = scmp.lt.s32.totalorder %s15, 1
        %s130 = scalar_select %p129, %s15, 1
        %s131 = smul.addr %s130, 3
        %s132 = smul.addr %s131, 8
        %s133 = scalar_lea.vmem %s1, %s132
        %p134 = scmp.lt.s32.totalorder %s15, 1
        %s135 = scalar_select %p134, %s15, 1
        %s136 = smul.addr %s135, 3
        %s137 = smul.addr %s136, 8
        %s138 = scalar_lea.vmem %s1, %s137
        %139 = vst [vmem:[#allocation2] sm:$0xff] 0.0
        %140 = vst [vmem:[#allocation2 + $0x8] sm:$0xff] 0.0
        %141 = vst [vmem:[#allocation2 + $0x10] sm:$0xff] 0.0
        %v142 = vld [vmem:[%s114] sm:$0xff]
        %v143 = vld [vmem:[%s114 + $0x8] sm:$0xff]
        %146 = vrot.lane.b32.xlu0 %v142, 2
        %v147 = vpop.permute.xlu0 %146
        %148 = vrot.lane.b32.xlu0 %v143, 2
        %v149 = vpop.permute.xlu0 %148
        %vm152 = vcmask 146448
        %153 = vst.msk [vmem:[#allocation2 + $0x4] sm:$0xff] %vm152, %v147
        %154 = vst.msk [vmem:[#allocation2 + $0xc] sm:$0xff] %vm152, %v149
        %v155 = vld [vmem:[#allocation2] sm:$0xff]
        %v156 = vld [vmem:[#allocation2 + $0x8] sm:$0xff]
        %v157 = vld [vmem:[#allocation2 + $0x10] sm:$0xff]
        %v158 = vmul.f32 %v155, 0.47943833
        %v159 = vmul.f32 %v156, 0.47943833
        %v160 = vmul.f32 %v157, 0.47943833
        %161 = vrot.lane.b32.xlu0 %v155, 1
        %v162 = vpop.permute.xlu0 %161
        %163 = vrot.lane.b32.xlu0 %v156, 1
        %v164 = vpop.permute.xlu0 %163
        %165 = vrot.lane.b32.xlu0 %v157, 1
        %v166 = vpop.permute.xlu0 %165
        %167 = vrot.lane.b32.xlu0 %v155, 127
        %v168 = vpop.permute.xlu0 %167
        %169 = vrot.lane.b32.xlu0 %v156, 127
        %v170 = vpop.permute.xlu0 %169
        %171 = vrot.lane.b32.xlu0 %v157, 127
        %v172 = vpop.permute.xlu0 %171
        %v173 = vadd.f32 %v162, %v168
        %v174 = vadd.f32 %v164, %v170
        %v175 = vadd.f32 %v166, %v172
        %v176 = vmul.f32 %v173, 0.23336768
        %v177 = vmul.f32 %v174, 0.23336768
        %v178 = vmul.f32 %v175, 0.23336768
        %v179 = vadd.f32 %v158, %v176
        %v180 = vadd.f32 %v159, %v177
        %v181 = vadd.f32 %v160, %v178
        %182 = vrot.lane.b32.xlu0 %v155, 2
        %v183 = vpop.permute.xlu0 %182
        %184 = vrot.lane.b32.xlu0 %v156, 2
        %v185 = vpop.permute.xlu0 %184
        %186 = vrot.lane.b32.xlu0 %v157, 2
        %v187 = vpop.permute.xlu0 %186
        %188 = vrot.lane.b32.xlu0 %v155, 126
        %v189 = vpop.permute.xlu0 %188
        %190 = vrot.lane.b32.xlu0 %v156, 126
        %v191 = vpop.permute.xlu0 %190
        %192 = vrot.lane.b32.xlu0 %v157, 126
        %v193 = vpop.permute.xlu0 %192
        %v194 = vadd.f32 %v183, %v189
        %v195 = vadd.f32 %v185, %v191
        %v196 = vadd.f32 %v187, %v193
        %v197 = vmul.f32 %v194, 0.026913157
        %v198 = vmul.f32 %v195, 0.026913157
        %v199 = vmul.f32 %v196, 0.026913157
        %v200 = vadd.f32 %v179, %v197
        %v201 = vadd.f32 %v180, %v198
        %v202 = vadd.f32 %v181, %v199
        %203 = vst [vmem:[#allocation3] sm:$0xff] %v200
        %204 = vst [vmem:[#allocation3 + $0x8] sm:$0xff] %v201
        %205 = vst [vmem:[#allocation3 + $0x10] sm:$0xff] %v202
        %v206 = vld [vmem:[#allocation3 + $0x2] sm:$0xff]
        %v207 = vld [vmem:[#allocation3 + $0xa] sm:$0xff]
        %v208 = vld [vmem:[#allocation3 + $0x12] sm:$0xf]
        %v209 = vmul.f32 %v206, 0.47943833
        %v210 = vmul.f32 %v207, 0.47943833
        %v211 = vmul.f32 %v208, 0.47943833
        %v212 = vld [vmem:[#allocation3 + $0x1] sm:$0xff]
        %v213 = vld [vmem:[#allocation3 + $0x9] sm:$0xff]
        %v214 = vld [vmem:[#allocation3 + $0x11] sm:$0xf]
        %v215 = vld [vmem:[#allocation3 + $0x3] sm:$0xff]
        %v216 = vld [vmem:[#allocation3 + $0xb] sm:$0xff]
        %v217 = vld [vmem:[#allocation3 + $0x13] sm:$0xf]
        %v218 = vadd.f32 %v212, %v215
        %v219 = vadd.f32 %v213, %v216
        %v220 = vadd.f32 %v214, %v217
        %v221 = vmul.f32 %v218, 0.23336768
        %v222 = vmul.f32 %v219, 0.23336768
        %v223 = vmul.f32 %v220, 0.23336768
        %v224 = vadd.f32 %v209, %v221
        %v225 = vadd.f32 %v210, %v222
        %v226 = vadd.f32 %v211, %v223
        %v227 = vld [vmem:[#allocation3] sm:$0xff]
        %v228 = vld [vmem:[#allocation3 + $0x8] sm:$0xff]
        %v229 = vld [vmem:[#allocation3 + $0x10] sm:$0xf]
        %v230 = vld [vmem:[#allocation3 + $0x4] sm:$0xff]
        %v231 = vld [vmem:[#allocation3 + $0xc] sm:$0xff]
        %v232 = vld [vmem:[#allocation3 + $0x14] sm:$0xf]
        %v233 = vadd.f32 %v227, %v230
        %v234 = vadd.f32 %v228, %v231
        %v235 = vadd.f32 %v229, %v232
        %v236 = vmul.f32 %v233, 0.026913157
        %v237 = vmul.f32 %v234, 0.026913157
        %v238 = vmul.f32 %v235, 0.026913157
        %v239 = vadd.f32 %v224, %v236
        %v240 = vadd.f32 %v225, %v237
        %v241 = vadd.f32 %v226, %v238
        %242 = vst [vmem:[%s138] sm:$0xff] %v239
        %243 = vst [vmem:[%s138 + $0x8] sm:$0xff] %v240
        %244 = vst [vmem:[%s138 + $0x10] sm:$0xf] %v241
        %p245 = scmp.lt.s32.totalorder %s15, 1
        %s246 = scalar_select %p245, %s15, 1
        %s247 = smul.addr %s246, 3
        %s248 = smul.addr %s247, 8
        %s249 = scalar_lea.vmem %s1, %s248
        // Predicated region
        $region29: #{tpu_custom_call.1} parent=23 // pred_check
          %p250 = pneg %p59
        $region30: #{tpu_custom_call.1} parent=23 // pred_check_branch
          %252 = sbr.rel (%p250) target = $region32
        $region31: #{tpu_custom_call.1} parent=23 // pred_region
          _
        $region32: #{tpu_custom_call.1} parent=23 // pred_fallthru
          _
      $region24: #{tpu_custom_call.1} parent=5 // pred_fallthru
        _
      %p253 = scmp.le.s32.totalorder 2, %s10
      // Predicated region
      $region33: #{tpu_custom_call.1} parent=5 // pred_check
        %p254 = pneg %p253
      $region34: #{tpu_custom_call.1} parent=5 // pred_check_branch
        %256 = sbr.rel (%p254) target = $region36
      $region35: #{tpu_custom_call.1} parent=5 // pred_region
        %s257 = ssub.s32 %s10, 2
        // Predicated region
        $region37: #{tpu_custom_call.1} parent=35 // pred_check
          %p258 = pneg %p65
        $region38: #{tpu_custom_call.1} parent=35 // pred_check_branch
          %260 = sbr.rel (%p258) target = $region40
        $region39: #{tpu_custom_call.1} parent=35 // pred_region
          %p261 = scmp.lt.s32.totalorder %s16, 1
          %s262 = scalar_select %p261, %s16, 1
          %s263 = smul.addr %s262, 3
          %s264 = smul.addr %s263, 8
          %s265 = scalar_lea.vmem %s1, %s264
        $region40: #{tpu_custom_call.1} parent=35 // pred_fallthru
          _
      $region36: #{tpu_custom_call.1} parent=5 // pred_fallthru
        _
    $region6: #{tpu_custom_call.1} parent=1 // loop_footer
      %s14 = sadd.s32 1, %s10
    $region7: #{tpu_custom_call.1} parent=1 // loop_footer_branch
      %9 = sbr.rel target = $region3
    $region8: #{tpu_custom_call.1} parent=1 // loop_exit
      _
    %266 = vsyncpa [#allocation5], 1
    %s267 = scalar_lea.sflag [#allocation5], 1
    %268 = vsyncpa %s267, 1

</llo_original>
